<compile_context>
chip_gen: v7x
topology: tpu7x:2x2x1
jax: 0.10.0
libtpu: 0.0.40
codegen_flags: <defaults>
</compile_context>

<pallas_src>
import functools
import math

import jax
import jax.numpy as jnp
from jax import lax
from jax.experimental import pallas as pl
from jax.experimental.pallas import tpu as pltpu


_TARGET_BLOCK_BYTES = 4 * 1024 * 1024   # ~4 MiB of input per grid step
_VMEM_BUDGET_BYTES = 20 * 1024 * 1024   # soft budget for all double-buffered blocks
_VMEM_LIMIT_BYTES = 32 * 1024 * 1024    # raises v5e's 16 MiB scoped default; <= v7x physical


def _round_up(a, b):
    return (a + b - 1) // b * b


def _num_tensorcores():
    """Best-effort TensorCore count (v7x has 2 per chip); default 1 (no split)."""
    try:
        info = pltpu.get_tpu_info()
    except Exception:
        return 1
    for attr in ("num_cores", "tensorcore_count", "num_tensorcores", "core_count",
                 "cores_per_chip"):
        v = getattr(info, attr, None)
        try:
            v = int(v)
        except (TypeError, ValueError):
            continue
        if v > 0:
            return v
    return 1


def _pad_value(dtype, is_float):
    if is_float:
        return jnp.array(jnp.inf, dtype=dtype)
    return jnp.array(jnp.iinfo(dtype).max, dtype=dtype)


def _min_argmin_sublane_kernel(x_ref, v_ref, i_ref, *, is_float, red_total, need_mask):
    # x_ref: (bB, kb, t_lane) -- reduce over axis 1 (sublane axis).
    # v_ref / i_ref: (bB, 1, t_lane) -- resident across the k (reduction) grid axis.
    k = pl.program_id(2)
    x = x_ref[...]
    kb = x.shape[1]
    row = lax.broadcasted_iota(jnp.int32, x.shape, dimension=1)
    if need_mask:
        x = jnp.where(row + k * kb < red_total, x, _pad_value(x.dtype, is_float))
    local_v = jnp.min(x, axis=1, keepdims=True)                    # (bB, 1, t_lane)
    match = x == local_v
    if is_float:
        match = match | (x != x)     # NaN-aware: min propagates NaN -> pick first NaN
    local_i = jnp.min(jnp.where(match, row, jnp.int32(kb)),
                      axis=1, keepdims=True) + k * kb              # global index

    @pl.when(k == 0)
    def _():
        v_ref[...] = local_v.astype(v_ref.dtype)
        i_ref[...] = local_i

    @pl.when(k > 0)
    def _():
        acc_v = v_ref[...]
        take = local_v < acc_v
        if is_float:
            take = take | ((local_v != local_v) & (acc_v == acc_v))
        v_ref[...] = jnp.where(take, local_v, acc_v).astype(v_ref.dtype)
        i_ref[...] = jnp.where(take, local_i, i_ref[...])


def _min_argmin_lane_kernel(x_ref, v_ref, i_ref, *, is_float, red_total, need_mask):
    # x_ref: (tm, tk) -- reduce over the lane axis.
    # v_ref / i_ref: (tm, 1) -- resident across the k (reduction) grid axis.
    k = pl.program_id(1)
    x = x_ref[...]
    tk = x.shape[-1]
    col = lax.broadcasted_iota(jnp.int32, x.shape, dimension=1)
    if need_mask:
        x = jnp.where(col + k * tk < red_total, x, _pad_value(x.dtype, is_float))
    local_v = jnp.min(x, axis=-1, keepdims=True)                   # (tm, 1)
    match = x == local_v
    if is_float:
        match = match | (x != x)
    local_i = jnp.min(jnp.where(match, col, jnp.int32(tk)),
                      axis=-1, keepdims=True) + k * tk             # global index

    @pl.when(k == 0)
    def _():
        v_ref[...] = local_v.astype(v_ref.dtype)
        i_ref[...] = local_i

    @pl.when(k > 0)
    def _():
        acc_v = v_ref[...]
        take = local_v < acc_v
        if is_float:
            take = take | ((local_v != local_v) & (acc_v == acc_v))
        v_ref[...] = jnp.where(take, local_v, acc_v).astype(v_ref.dtype)
        i_ref[...] = jnp.where(take, local_i, i_ref[...])


def min_with_index(x, dim, *, _force_kb=None, _force_tk=None):
    """Equivalent of torch.min(x, dim) -> (values, indices[int32])."""
    ndim = x.ndim
    dim = dim % ndim
    out_shape = tuple(s for i, s in enumerate(x.shape) if i != dim)
    is_float = bool(jnp.issubdtype(x.dtype, jnp.floating))
    itemsize = jnp.dtype(x.dtype).itemsize
    cores = _num_tensorcores()

    n_elems = x.size
    n_out = max(1, n_elems // max(1, x.shape[dim]))
    cost = pl.CostEstimate(
        flops=3 * n_elems,
        transcendentals=0,
        bytes_accessed=n_elems * itemsize + n_out * (itemsize + 4),
    )

    if dim != ndim - 1:
        # ---- sublane-reduction path: no transpose, lane-dense outputs ----
        B = math.prod(x.shape[:dim]) if dim > 0 else 1
        Kd = x.shape[dim]
        T = math.prod(x.shape[dim + 1:])
        x3d = x.reshape(B, Kd, T)                 # free (row-major) reshape

        # 1) lane tile: full T if it fits, else a multiple of 128.
        lane_cap = max(128, (_TARGET_BLOCK_BYTES // (8 * itemsize)) // 128 * 128)
        t_lane = T if (T <= 128 or _round_up(T, 128) <= lane_cap) else lane_cap
        t_pad = _round_up(t_lane, 128)

        # 2) reduced-dim tile: full Kd if it fits, else a multiple of 8 (tiled
        #    reduction with in-kernel masking of the ragged last tile).
        if _force_kb is not None:
            kb = _force_kb if _force_kb < Kd else Kd
        elif Kd * t_pad * itemsize <= _TARGET_BLOCK_BYTES or Kd <= 8:
            kb = Kd
        else:
            kb = max(8, (_TARGET_BLOCK_BYTES // (t_pad * itemsize)) // 8 * 8)
        nk = pl.cdiv(Kd, kb)
        need_mask = (nk > 1) and (Kd % kb != 0)

        # 3) batch tile: fold several B slices per step when blocks are tiny.
        if kb == Kd and B > 1:
            per_b_in = 2 * Kd * t_pad * itemsize           # double-buffered input
            per_b_out = 2 * 8 * t_pad * (itemsize + 4)     # padded (bB,1,t) outs x2 bufs
            bB = _VMEM_BUDGET_BYTES // max(1, per_b_in + per_b_out)
            bB = min(bB, max(1, _TARGET_BLOCK_BYTES // max(1, Kd * t_pad * itemsize)))
            bB = max(1, min(bB, B))
        else:
            bB = 1

        if cores >= 2 and pl.cdiv(B, bB) * pl.cdiv(T, t_lane) < 2:
            # keep >=2 parallel steps so both TensorCores (v7x) get work
            if bB > 1:
                bB = max(1, pl.cdiv(B, 2))
            elif t_lane > 128:
                t_lane = max(128, _round_up(pl.cdiv(T, 2), 128))

        grid = (pl.cdiv(B, bB), pl.cdiv(T, t_lane), nk)

        vals, idxs = pl.pallas_call(
            functools.partial(_min_argmin_sublane_kernel, is_float=is_float,
                              red_total=Kd, need_mask=need_mask),
            out_shape=(
                jax.ShapeDtypeStruct((B, 1, T), x.dtype),
                jax.ShapeDtypeStruct((B, 1, T), jnp.int32),
            ),
            grid_spec=pltpu.PrefetchScalarGridSpec(
                num_scalar_prefetch=0,
                grid=grid,
                in_specs=[pl.BlockSpec((bB, kb, t_lane), lambda b, j, k: (b, k, j))],
                out_specs=[
                    pl.BlockSpec((bB, 1, t_lane), lambda b, j, k: (b, 0, j)),
                    pl.BlockSpec((bB, 1, t_lane), lambda b, j, k: (b, 0, j)),
                ],
            ),
            compiler_params=pltpu.CompilerParams(
                dimension_semantics=("parallel", "parallel", "arbitrary"),
                vmem_limit_bytes=_VMEM_LIMIT_BYTES,
            ),
            cost_estimate=cost,
        )(x3d)
        return vals.reshape(out_shape), idxs.reshape(out_shape)

    # ---- lane-reduction path: dim is already the last (lane) axis ----
    K = x.shape[-1]
    M = math.prod(out_shape) if out_shape else 1
    x2d = x.reshape(M, K)                         # free reshape
    K_pad = _round_up(K, 128)

    # 1) reduced-dim tile: full K if an 8-row slab fits, else a multiple of 128.
    if _force_tk is not None:
        tk = _force_tk if _force_tk < K else K
    elif 8 * K_pad * itemsize <= _TARGET_BLOCK_BYTES or K <= 128:
        tk = K
    else:
        tk = max(128, (_TARGET_BLOCK_BYTES // (8 * itemsize)) // 128 * 128)
    nk = pl.cdiv(K, tk)
    tk_pad = K_pad if tk == K else _round_up(tk, 128)
    need_mask = (nk > 1) and (K % tk != 0)

    # 2) row tile: budget BOTH the input block and the lane-padded (tm, 1)
    #    output buffers (two outputs, double-buffered -> 2*128*(itemsize+4)/row).
    if M <= 8:
        tm = M                                    # full-extent block (allowed)
    else:
        per_row = 2 * tk_pad * itemsize + 2 * 128 * (itemsize + 4)
        tm = _VMEM_BUDGET_BYTES // max(1, per_row)
        tm = min(tm, _TARGET_BLOCK_BYTES // max(1, tk_pad * itemsize))
        tm = max(8, tm // 8 * 8)
        tm = min(tm, _round_up(M, 8))
        if cores >= 2 and pl.cdiv(M, tm) < 2:
            # keep >=2 parallel steps so both TensorCores (v7x) get work
            tm = min(tm, max(8, _round_up(pl.cdiv(M, 2), 8)))
    grid = (pl.cdiv(M, tm), nk)

    vals, idxs = pl.pallas_call(
        functools.partial(_min_argmin_lane_kernel, is_float=is_float,
                          red_total=K, need_mask=need_mask),
        out_shape=(
            jax.ShapeDtypeStruct((M, 1), x.dtype),
            jax.ShapeDtypeStruct((M, 1), jnp.int32),
        ),
        grid_spec=pltpu.PrefetchScalarGridSpec(
            num_scalar_prefetch=0,
            grid=grid,
            in_specs=[pl.BlockSpec((tm, tk), lambda i, k: (i, k))],
            out_specs=[
                pl.BlockSpec((tm, 1), lambda i, k: (i, 0)),
                pl.BlockSpec((tm, 1), lambda i, k: (i, 0)),
            ],
        ),
        compiler_params=pltpu.CompilerParams(
            dimension_semantics=("parallel", "arbitrary"),
            vmem_limit_bytes=_VMEM_LIMIT_BYTES,
        ),
        cost_estimate=cost,
    )(x2d)
    return vals.reshape(out_shape), idxs.reshape(out_shape)


if __name__ == "__main__":
    key = jax.random.PRNGKey(0)
    x = jax.random.normal(key, (2, 4, 16, 16), dtype=jnp.float32)

    # 1) Non-last-axis path (sublane reduction, lane-dense outputs), dim=1 as in the test.
    vals, idxs = min_with_index(x, 1)
    jax.block_until_ready((vals, idxs))
    ref_v = jnp.min(x, axis=1)
    ref_i = jnp.argmin(x, axis=1).astype(jnp.int32)
    assert vals.shape == ref_v.shape and idxs.shape == ref_i.shape
    assert jnp.allclose(vals, ref_v)
    assert jnp.array_equal(idxs, ref_i)

    # 2) Last-axis path (lane reduction).
    v2, i2 = min_with_index(x, -1)
    jax.block_until_ready((v2, i2))
    assert jnp.allclose(v2, jnp.min(x, axis=-1))
    assert jnp.array_equal(i2, jnp.argmin(x, axis=-1).astype(jnp.int32))

    # 3) Tiled-reduction accumulator paths (forced small reduced-dim tiles + ragged mask).
    x3 = jax.random.normal(jax.random.PRNGKey(1), (2, 37, 16, 16), dtype=jnp.float32)
    v3, i3 = min_with_index(x3, 1, _force_kb=8)
    jax.block_until_ready((v3, i3))
    assert jnp.allclose(v3, jnp.min(x3, axis=1))
    assert jnp.array_equal(i3, jnp.argmin(x3, axis=1).astype(jnp.int32))

    x4 = jax.random.normal(jax.random.PRNGKey(2), (4, 200), dtype=jnp.float32)
    v4, i4 = min_with_index(x4, -1, _force_tk=128)
    jax.block_until_ready((v4, i4))
    assert jnp.allclose(v4, jnp.min(x4, axis=-1))
    assert jnp.array_equal(i4, jnp.argmin(x4, axis=-1).astype(jnp.int32))

    # 4) NaN semantics match torch.min: NaN wins, index of the first NaN.
    xn = jnp.array([[1.0, jnp.nan, -2.0, jnp.nan],
                    [3.0, 0.5, 0.5, 2.0]], dtype=jnp.float32)
    vn, i_n = min_with_index(xn, 1)
    jax.block_until_ready((vn, i_n))
    assert bool(jnp.isnan(vn[0])) and int(i_n[0]) == 1
    assert float(vn[1]) == 0.5 and int(i_n[1]) == 1

    print("KERNEL_OK")
</pallas_src>

<mosaic_0001>
module attributes {stable_mosaic.version = 11 : i64} {
  func.func @_min_argmin_sublane_kernel(%arg0: i32, %arg1: i32, %arg2: i32, %arg3: memref<2x4x256xf32, #tpu.memory_space<vmem>>, %arg4: memref<2x1x256xf32, #tpu.memory_space<vmem>>, %arg5: memref<2x1x256xi32, #tpu.memory_space<vmem>>) attributes {dimension_semantics = [#tpu.dimension_semantics<parallel>, #tpu.dimension_semantics<parallel>, #tpu.dimension_semantics<arbitrary>], iteration_bounds = array<i64: 1, 1, 1>, scalar_prefetch = 0 : i64, scratch_operands = 0 : i64, tpu.core_type = #tpu.core_type<tc>, window_params = [{transform_indices = @transform_0, window_bounds = array<i64: 2, 4, 256>}, {transform_indices = @transform_1, window_bounds = array<i64: 2, 1, 256>}, {transform_indices = @transform_2, window_bounds = array<i64: 2, 1, 256>}]} {
    %c0 = arith.constant 0 : index
    %c0_0 = arith.constant 0 : index
    %c0_1 = arith.constant 0 : index
    %0 = vector.load %arg3[%c0, %c0_0, %c0_1] : memref<2x4x256xf32, #tpu.memory_space<vmem>>, vector<2x4x256xf32>
    %1 = tpu.iota {dimensions = array<i32: 1>} : vector<2x4x256xi32>
    %cst = arith.constant dense<0x7F800000> : vector<2x256xf32>
    %2 = vector.multi_reduction <minimumf>, %0, %cst [1] : vector<2x4x256xf32> to vector<2x256xf32>
    %3 = vector.shape_cast %2 : vector<2x256xf32> to vector<2x1x256xf32>
    %4 = vector.broadcast %3 : vector<2x1x256xf32> to vector<2x4x256xf32>
    %5 = arith.cmpf oeq, %0, %4 : vector<2x4x256xf32>
    %6 = arith.cmpf one, %0, %0 : vector<2x4x256xf32>
    %7 = arith.ori %5, %6 : vector<2x4x256xi1>
    %c4_i32 = arith.constant 4 : i32
    %8 = vector.broadcast %c4_i32 : i32 to vector<2x4x256xi32>
    %9 = arith.select %7, %1, %8 : vector<2x4x256xi1>, vector<2x4x256xi32>
    %cst_2 = arith.constant dense<2147483647> : vector<2x256xi32>
    %10 = vector.multi_reduction <minsi>, %9, %cst_2 [1] : vector<2x4x256xi32> to vector<2x256xi32>
    %11 = vector.shape_cast %10 : vector<2x256xi32> to vector<2x1x256xi32>
    %c4_i32_3 = arith.constant 4 : i32
    %12 = arith.muli %arg2, %c4_i32_3 : i32
    %13 = vector.broadcast %12 : i32 to vector<2x1x256xi32>
    %14 = arith.addi %11, %13 : vector<2x1x256xi32>
    %c0_i32 = arith.constant 0 : i32
    %15 = arith.cmpi eq, %arg2, %c0_i32 : i32
    %16 = arith.extui %15 : i1 to i32
    %c0_i32_4 = arith.constant 0 : i32
    %17 = arith.cmpi ne, %16, %c0_i32_4 : i32
    scf.if %17 {
      %c0_7 = arith.constant 0 : index
      %c0_8 = arith.constant 0 : index
      %c0_9 = arith.constant 0 : index
      %21 = vector.load %arg4[%c0_7, %c0_8, %c0_9] : memref<2x1x256xf32, #tpu.memory_space<vmem>>, vector<2x1x256xf32>
      tpu.vector_store %arg4[%c0_7, %c0_8, %c0_9], %3 {strides = array<i32>} : memref<2x1x256xf32, #tpu.memory_space<vmem>>, vector<2x1x256xf32>,
      %c0_10 = arith.constant 0 : index
      %c0_11 = arith.constant 0 : index
      %c0_12 = arith.constant 0 : index
      %22 = vector.load %arg5[%c0_10, %c0_11, %c0_12] : memref<2x1x256xi32, #tpu.memory_space<vmem>>, vector<2x1x256xi32>
      tpu.vector_store %arg5[%c0_10, %c0_11, %c0_12], %14 {strides = array<i32>} : memref<2x1x256xi32, #tpu.memory_space<vmem>>, vector<2x1x256xi32>,
    } else {
    }
    %c0_i32_5 = arith.constant 0 : i32
    %18 = arith.cmpi sgt, %arg2, %c0_i32_5 : i32
    %19 = arith.extui %18 : i1 to i32
    %c0_i32_6 = arith.constant 0 : i32
    %20 = arith.cmpi ne, %19, %c0_i32_6 : i32
    scf.if %20 {
      %c0_7 = arith.constant 0 : index
      %c0_8 = arith.constant 0 : index
      %c0_9 = arith.constant 0 : index
      %21 = vector.load %arg4[%c0_7, %c0_8, %c0_9] : memref<2x1x256xf32, #tpu.memory_space<vmem>>, vector<2x1x256xf32>
      %22 = arith.cmpf olt, %3, %21 : vector<2x1x256xf32>
      %23 = arith.cmpf one, %3, %3 : vector<2x1x256xf32>
      %24 = arith.cmpf oeq, %21, %21 : vector<2x1x256xf32>
      %25 = arith.andi %23, %24 : vector<2x1x256xi1>
      %26 = arith.ori %22, %25 : vector<2x1x256xi1>
      %27 = arith.select %26, %3, %21 : vector<2x1x256xi1>, vector<2x1x256xf32>
      %c0_10 = arith.constant 0 : index
      %c0_11 = arith.constant 0 : index
      %c0_12 = arith.constant 0 : index
      %28 = vector.load %arg4[%c0_10, %c0_11, %c0_12] : memref<2x1x256xf32, #tpu.memory_space<vmem>>, vector<2x1x256xf32>
      tpu.vector_store %arg4[%c0_10, %c0_11, %c0_12], %27 {strides = array<i32>} : memref<2x1x256xf32, #tpu.memory_space<vmem>>, vector<2x1x256xf32>,
      %c0_13 = arith.constant 0 : index
      %c0_14 = arith.constant 0 : index
      %c0_15 = arith.constant 0 : index
      %29 = vector.load %arg5[%c0_13, %c0_14, %c0_15] : memref<2x1x256xi32, #tpu.memory_space<vmem>>, vector<2x1x256xi32>
      %30 = arith.select %26, %14, %29 : vector<2x1x256xi1>, vector<2x1x256xi32>
      %c0_16 = arith.constant 0 : index
      %c0_17 = arith.constant 0 : index
      %c0_18 = arith.constant 0 : index
      %31 = vector.load %arg5[%c0_16, %c0_17, %c0_18] : memref<2x1x256xi32, #tpu.memory_space<vmem>>, vector<2x1x256xi32>
      tpu.vector_store %arg5[%c0_16, %c0_17, %c0_18], %30 {strides = array<i32>} : memref<2x1x256xi32, #tpu.memory_space<vmem>>, vector<2x1x256xi32>,
    } else {
    }
    return
  }
  func.func @transform_0(%arg0: i32, %arg1: i32, %arg2: i32) -> (i32, i32, i32) {
    %c0_i32 = arith.constant 0 : i32
    return %arg0, %arg2, %arg1 : i32, i32, i32
  }
  func.func @transform_1(%arg0: i32, %arg1: i32, %arg2: i32) -> (i32, i32, i32) {
    %c0_i32 = arith.constant 0 : i32
    %c0_i32_0 = arith.constant 0 : i32
    return %arg0, %c0_i32, %arg1 : i32, i32, i32
  }
  func.func @transform_2(%arg0: i32, %arg1: i32, %arg2: i32) -> (i32, i32, i32) {
    %c0_i32 = arith.constant 0 : i32
    %c0_i32_0 = arith.constant 0 : i32
    return %arg0, %c0_i32, %arg1 : i32, i32, i32
  }
}

</mosaic_0001>

<llo_original>
// kernel: tpu_custom_call.1
$region0: #{tpu_custom_call.1}
  #allocation0 [shape = 'u32[]', space=smem, size = 0x4, offset = 0x4, fixed_abs, tag = 'smem constant byte address 0x4 - core index']
  #allocation1 [shape = 'u32[144,128]{1,0:T(1,128)}', space=vmem, size = 0x12000, scoped, tag = 'internal scratch']
  %s0 = inlined_call_operand.hbm [shape: f32[2,4,256], index: 0, kind: input, shape index: {}]
  %s1 = inlined_call_operand.hbm [shape: f32[2,1,256], index: 1, kind: output, shape index: {0}]
  %s2 = inlined_call_operand.hbm [shape: s32[2,1,256], index: 2, kind: output, shape index: {1}]
  %3 = xla_tuple %s1, %s2
  %s4 = sld [smem:[#allocation0]]
  $region34: #{tpu_custom_call.1} parent=0
    _
  %s6 = ssub.s32 1, %s4
  %s7 = scalar_select 0, %s6, %s4
  $region1: #{tpu_custom_call.1} parent=0
    #allocation2 [shape = 'u8[8192]{0}', space=vmem, size = 0x2000, scoped, tag = 'input window, operand 0, single buffered']
    #allocation3 [shape = 's32[1]{0}', space=sflag, size = 0x4, scoped, tag = 'scoped memory for tpu_custom_call.1']
    #allocation4 [shape = 's32[1]{0}', space=sflag, size = 0x4, scoped, tag = 'scoped memory for tpu_custom_call.1']
    #allocation5 [shape = 'u8[2048]{0}', space=vmem, size = 0x800, scoped, tag = 'output window, operand 0, single buffered']
    #allocation6 [shape = 'u8[2048]{0}', space=vmem, size = 0x800, scoped, tag = 'output window, operand 1, single buffered']
    #allocation7 [shape = 's32[1]{0}', space=sflag, size = 0x4, scoped, tag = 'scoped memory for tpu_custom_call.1']
    %8 = vsyncpa [#allocation3], 0
    %9 = vsyncpa [#allocation4], 0
    %10 = vsyncpa [#allocation7], 0
    // Predicated region
    $region2: #{tpu_custom_call.1} parent=1 // pred_check
      _
    $region3: #{tpu_custom_call.1} parent=1 // pred_check_branch
      %12 = sbr.rel (0) target = $region5
    $region4: #{tpu_custom_call.1} parent=1 // pred_region
      %s14 = ssub.s32 256, 256
      %15 = vsyncadd [#allocation3], %s14
      %s16 = sshll.u32 [#allocation2], 4
      %s17 = int_to_ptr.vmem [resolvable:$true] %s16
      %22 = dma.hbm_to_vmem [thread:$0]  %s0, 256, %s17, [#allocation3], 128, 128, 8
    $region5: #{tpu_custom_call.1} parent=1 // pred_fallthru
      _
    // Predicated region
    $region6: #{tpu_custom_call.1} parent=1 // pred_check
      _
    $region7: #{tpu_custom_call.1} parent=1 // pred_check_branch
      %24 = sbr.rel (0) target = $region9
    $region8: #{tpu_custom_call.1} parent=1 // pred_region
      %25 = dma.done [#allocation3], 256
    $region9: #{tpu_custom_call.1} parent=1 // pred_fallthru
      _
    %v26 = vld [vmem:[#allocation2] sm:$0xff]
    %v27 = vld [vmem:[#allocation2 + $0x8] sm:$0xff]
    %v28 = vlaneseq
    %v29 = vshrl.u32 %v28, 7
    %v32 = vcombine.high %v26, %v26
    %v33 = vcombine.high %v27, %v27
    %vm36 = vcmask 1043456
    %v37 = vsel %vm36, %v26, inf
    %v38 = vrot.slane %v37, 4
    %v39 = vmin.f32 %v37, %v38
    %v40 = vrot.slane %v39, 2
    %v41 = vmin.f32 %v39, %v40
    %v42 = vrot.slane %v41, 1
    %v43 = vmin.f32 %v41, %v42
    %v44 = vsel %vm36, %v32, inf
    %v45 = vrot.slane %v44, 4
    %v46 = vmin.f32 %v44, %v45
    %v47 = vrot.slane %v46, 2
    %v48 = vmin.f32 %v46, %v47
    %v49 = vrot.slane %v48, 1
    %v50 = vmin.f32 %v48, %v49
    %v51 = vsel %vm36, %v27, inf
    %v52 = vrot.slane %v51, 4
    %v53 = vmin.f32 %v51, %v52
    %v54 = vrot.slane %v53, 2
    %v55 = vmin.f32 %v53, %v54
    %v56 = vrot.slane %v55, 1
    %v57 = vmin.f32 %v55, %v56
    %v58 = vsel %vm36, %v33, inf
    %v59 = vrot.slane %v58, 4
    %v60 = vmin.f32 %v58, %v59
    %v61 = vrot.slane %v60, 2
    %v62 = vmin.f32 %v60, %v61
    %v63 = vrot.slane %v62, 1
    %v64 = vmin.f32 %v62, %v63
    %v69 = vcombine.low %v43, %v50
    %v70 = vcombine.low %v57, %v64
    %vm73 = vcmp.eq.f32.partialorder %v26, %v69
    %vm74 = vcmp.eq.f32.partialorder %v27, %v70
    %vm75 = vcmp.ne.f32.partialorder %v26, %v26
    %vm76 = vcmp.ne.f32.partialorder %v27, %v27
    %vm77 = vmor %vm73, %vm75
    %vm78 = vmor %vm74, %vm76
    %v80 = vunpack.c.l.s4 839922192
    %v81 = vunpack.c.0.s8 %v80
    %v82 = vlaneseq
    %v83 = vshrl.u32 %v82, 7
    %v84 = vsub.s32 %v81, %v83
    %v85 = vrot.slane %v29, %v84
    %v86 = vsel %vm77, %v85, 4
    %v87 = vsel %vm78, %v85, 4
    %v88 = vcombine.high %v86, %v86
    %v89 = vcombine.high %v87, %v87
    %v90 = vsel %vm36, %v86, 2147483647
    %v91 = vrot.slane %v90, 4
    %vm92 = vcmp.lt.s32.totalorder %v90, %v91
    %v93 = vsel %vm92, %v90, %v91
    %v94 = vrot.slane %v93, 2
    %vm95 = vcmp.lt.s32.totalorder %v93, %v94
    %v96 = vsel %vm95, %v93, %v94
    %v97 = vrot.slane %v96, 1
    %vm98 = vcmp.lt.s32.totalorder %v96, %v97
    %v99 = vsel %vm98, %v96, %v97
    %v100 = vsel %vm36, %v88, 2147483647
    %v101 = vrot.slane %v100, 4
    %vm102 = vcmp.lt.s32.totalorder %v100, %v101
    %v103 = vsel %vm102, %v100, %v101
    %v104 = vrot.slane %v103, 2
    %vm105 = vcmp.lt.s32.totalorder %v103, %v104
    %v106 = vsel %vm105, %v103, %v104
    %v107 = vrot.slane %v106, 1
    %vm108 = vcmp.lt.s32.totalorder %v106, %v107
    %v109 = vsel %vm108, %v106, %v107
    %v110 = vsel %vm36, %v87, 2147483647
    %v111 = vrot.slane %v110, 4
    %vm112 = vcmp.lt.s32.totalorder %v110, %v111
    %v113 = vsel %vm112, %v110, %v111
    %v114 = vrot.slane %v113, 2
    %vm115 = vcmp.lt.s32.totalorder %v113, %v114
    %v116 = vsel %vm115, %v113, %v114
    %v117 = vrot.slane %v116, 1
    %vm118 = vcmp.lt.s32.totalorder %v116, %v117
    %v119 = vsel %vm118, %v116, %v117
    %v120 = vsel %vm36, %v89, 2147483647
    %v121 = vrot.slane %v120, 4
    %vm122 = vcmp.lt.s32.totalorder %v120, %v121
    %v123 = vsel %vm122, %v120, %v121
    %v124 = vrot.slane %v123, 2
    %vm125 = vcmp.lt.s32.totalorder %v123, %v124
    %v126 = vsel %vm125, %v123, %v124
    %v127 = vrot.slane %v126, 1
    %vm128 = vcmp.lt.s32.totalorder %v126, %v127
    %v129 = vsel %vm128, %v126, %v127
    %s130 = smul.u32 0, 4
    %v131 = vstv %s130
    %v132 = vadd.s32 %v99, %v131
    %v133 = vadd.s32 %v109, %v131
    %v134 = vadd.s32 %v119, %v131
    %v135 = vadd.s32 %v129, %v131
    %p136 = scmp.eq.s32.totalorder 0, 0
    // Predicated region
    $region10: #{tpu_custom_call.1} parent=1 // pred_check
      %p137 = pneg %p136
    $region11: #{tpu_custom_call.1} parent=1 // pred_check_branch
      %139 = sbr.rel (%p137) target = $region13
    $region12: #{tpu_custom_call.1} parent=1 // pred_region
      %v141 = vunpack.c.l.s4 1966171168
      %v142 = vunpack.c.0.s8 %v141
      %v143 = vlaneseq
      %v144 = vshrl.u32 %v143, 7
      %v145 = vsub.s32 %v142, %v144
      %v146 = vrot.slane %v69, %v145
      %v148 = vunpack.c.l.s4 1966171168
      %v149 = vunpack.c.0.s8 %v148
      %v150 = vlaneseq
      %v151 = vshrl.u32 %v150, 7
      %v152 = vsub.s32 %v149, %v151
      %v153 = vrot.slane %v146, %v152
      %v155 = vunpack.c.l.s4 1966171168
      %v156 = vunpack.c.0.s8 %v155
      %v157 = vlaneseq
      %v158 = vshrl.u32 %v157, 7
      %v159 = vsub.s32 %v156, %v158
      %v160 = vrot.slane %v70, %v159
      %v162 = vunpack.c.l.s4 1966171168
      %v163 = vunpack.c.0.s8 %v162
      %v164 = vlaneseq
      %v165 = vshrl.u32 %v164, 7
      %v166 = vsub.s32 %v163, %v165
      %v167 = vrot.slane %v160, %v166
      %v170 = vlaneseq
      %vm171 = vcmp.ge.s32.totalorder %v170, 0
      %vm172 = vcmp.lt.s32.totalorder %v170, 256
      %vm173 = vmand %vm171, %vm172
      %174 = vst.msk [vmem:[#allocation5] sm:$0x3] %vm173, %v153
      %175 = vst.msk [vmem:[#allocation5 + $0x2] sm:$0x3] %vm173, %v167
      %v176 = vcombine.low %v132, %v133
      %v178 = vunpack.c.l.s4 1966171168
      %v179 = vunpack.c.0.s8 %v178
      %v180 = vlaneseq
      %v181 = vshrl.u32 %v180, 7
      %v182 = vsub.s32 %v179, %v181
      %v183 = vrot.slane %v176, %v182
      %v185 = vunpack.c.l.s4 1966171168
      %v186 = vunpack.c.0.s8 %v185
      %v187 = vlaneseq
      %v188 = vshrl.u32 %v187, 7
      %v189 = vsub.s32 %v186, %v188
      %v190 = vrot.slane %v183, %v189
      %v191 = vcombine.low %v134, %v135
      %v193 = vunpack.c.l.s4 1966171168
      %v194 = vunpack.c.0.s8 %v193
      %v195 = vlaneseq
      %v196 = vshrl.u32 %v195, 7
      %v197 = vsub.s32 %v194, %v196
      %v198 = vrot.slane %v191, %v197
      %v200 = vunpack.c.l.s4 1966171168
      %v201 = vunpack.c.0.s8 %v200
      %v202 = vlaneseq
      %v203 = vshrl.u32 %v202, 7
      %v204 = vsub.s32 %v201, %v203
      %v205 = vrot.slane %v198, %v204
      %206 = vst.msk [vmem:[#allocation6] sm:$0x3] %vm173, %v190
      %207 = vst.msk [vmem:[#allocation6 + $0x2] sm:$0x3] %vm173, %v205
    $region13: #{tpu_custom_call.1} parent=1 // pred_fallthru
      _
    %p208 = scmp.gt.s32.totalorder 0, 0
    // Predicated region
    $region14: #{tpu_custom_call.1} parent=1 // pred_check
      %p209 = pneg %p208
    $region15: #{tpu_custom_call.1} parent=1 // pred_check_branch
      %211 = sbr.rel (%p209) target = $region17
    $region16: #{tpu_custom_call.1} parent=1 // pred_region
      %v212 = vld [vmem:[#allocation5] sm:$0x3]
      %v213 = vld [vmem:[#allocation5 + $0x2] sm:$0x3]
      %v216 = vlaneseq
      %v217 = vshrl.u32 %v216, 7
      %v218 = vsub.s32 0, %v217
      %v219 = vrot.slane %v212, %v218
      %v220 = vlaneseq
      %v221 = vshrl.u32 %v220, 7
      %v222 = vsub.s32 1, %v221
      %v223 = vrot.slane %v212, %v222
      %v224 = vlaneseq
      %v225 = vshrl.u32 %v224, 7
      %v226 = vsub.s32 0, %v225
      %v227 = vrot.slane %v213, %v226
      %v228 = vlaneseq
      %v229 = vshrl.u32 %v228, 7
      %v230 = vsub.s32 1, %v229
      %v231 = vrot.slane %v213, %v230
      %vm236 = vcmp.lt.f32.partialorder %v43, %v219
      %vm237 = vcmp.lt.f32.partialorder %v50, %v223
      %vm238 = vcmp.lt.f32.partialorder %v57, %v227
      %vm239 = vcmp.lt.f32.partialorder %v64, %v231
      %vm240 = vcmp.ne.f32.partialorder %v43, %v43
      %vm241 = vcmp.ne.f32.partialorder %v50, %v50
      %vm242 = vcmp.ne.f32.partialorder %v57, %v57
      %vm243 = vcmp.ne.f32.partialorder %v64, %v64
      %vm244 = vcmp.eq.f32.partialorder %v212, %v212
      %vm245 = vcmp.eq.f32.partialorder %v213, %v213
      %v246 = vsel %vm244, 1, 0
      %v247 = vsel %vm245, 1, 0
      %v248 = vlaneseq
      %v249 = vshrl.u32 %v248, 7
      %v250 = vsub.s32 0, %v249
      %v251 = vrot.slane %v246, %v250
      %v252 = vlaneseq
      %v253 = vshrl.u32 %v252, 7
      %v254 = vsub.s32 1, %v253
      %v255 = vrot.slane %v246, %v254
      %v256 = vlaneseq
      %v257 = vshrl.u32 %v256, 7
      %v258 = vsub.s32 0, %v257
      %v259 = vrot.slane %v247, %v258
      %v260 = vlaneseq
      %v261 = vshrl.u32 %v260, 7
      %v262 = vsub.s32 1, %v261
      %v263 = vrot.slane %v247, %v262
      %vm264 = vcmp.ne.s32.totalorder %v251, 0
      %vm265 = vcmp.ne.s32.totalorder %v255, 0
      %vm266 = vcmp.ne.s32.totalorder %v259, 0
      %vm267 = vcmp.ne.s32.totalorder %v263, 0
      %vm268 = vmand %vm240, %vm264
      %vm269 = vmand %vm241, %vm265
      %vm270 = vmand %vm242, %vm266
      %vm271 = vmand %vm243, %vm267
      %vm272 = vmor %vm236, %vm268
      %vm273 = vmor %vm237, %vm269
      %vm274 = vmor %vm238, %vm270
      %vm275 = vmor %vm239, %vm271
      %v276 = vsel %vm272, %v43, %v219
      %v277 = vsel %vm273, %v50, %v223
      %v278 = vsel %vm274, %v57, %v227
      %v279 = vsel %vm275, %v64, %v231
      %v284 = vcombine.low %v276, %v277
      %v286 = vunpack.c.l.s4 1966171168
      %v287 = vunpack.c.0.s8 %v286
      %v288 = vlaneseq
      %v289 = vshrl.u32 %v288, 7
      %v290 = vsub.s32 %v287, %v289
      %v291 = vrot.slane %v284, %v290
      %v293 = vunpack.c.l.s4 1966171168
      %v294 = vunpack.c.0.s8 %v293
      %v295 = vlaneseq
      %v296 = vshrl.u32 %v295, 7
      %v297 = vsub.s32 %v294, %v296
      %v298 = vrot.slane %v291, %v297
      %v299 = vcombine.low %v278, %v279
      %v301 = vunpack.c.l.s4 1966171168
      %v302 = vunpack.c.0.s8 %v301
      %v303 = vlaneseq
      %v304 = vshrl.u32 %v303, 7
      %v305 = vsub.s32 %v302, %v304
      %v306 = vrot.slane %v299, %v305
      %v308 = vunpack.c.l.s4 1966171168
      %v309 = vunpack.c.0.s8 %v308
      %v310 = vlaneseq
      %v311 = vshrl.u32 %v310, 7
      %v312 = vsub.s32 %v309, %v311
      %v313 = vrot.slane %v306, %v312
      %v316 = vlaneseq
      %vm317 = vcmp.ge.s32.totalorder %v316, 0
      %vm318 = vcmp.lt.s32.totalorder %v316, 256
      %vm319 = vmand %vm317, %vm318
      %320 = vst.msk [vmem:[#allocation5] sm:$0x3] %vm319, %v298
      %321 = vst.msk [vmem:[#allocation5 + $0x2] sm:$0x3] %vm319, %v313
      %v322 = vld [vmem:[#allocation6] sm:$0x3]
      %v323 = vld [vmem:[#allocation6 + $0x2] sm:$0x3]
      %v324 = vlaneseq
      %v325 = vshrl.u32 %v324, 7
      %v326 = vsub.s32 0, %v325
      %v327 = vrot.slane %v322, %v326
      %v328 = vlaneseq
      %v329 = vshrl.u32 %v328, 7
      %v330 = vsub.s32 1, %v329
      %v331 = vrot.slane %v322, %v330
      %v332 = vlaneseq
      %v333 = vshrl.u32 %v332, 7
      %v334 = vsub.s32 0, %v333
      %v335 = vrot.slane %v323, %v334
      %v336 = vlaneseq
      %v337 = vshrl.u32 %v336, 7
      %v338 = vsub.s32 1, %v337
      %v339 = vrot.slane %v323, %v338
      %v340 = vsel %vm272, %v132, %v327
      %v341 = vsel %vm273, %v133, %v331
      %v342 = vsel %vm274, %v134, %v335
      %v343 = vsel %vm275, %v135, %v339
      %v344 = vcombine.low %v340, %v341
      %v346 = vunpack.c.l.s4 1966171168
      %v347 = vunpack.c.0.s8 %v346
      %v348 = vlaneseq
      %v349 = vshrl.u32 %v348, 7
      %v350 = vsub.s32 %v347, %v349
      %v351 = vrot.slane %v344, %v350
      %v353 = vunpack.c.l.s4 1966171168
      %v354 = vunpack.c.0.s8 %v353
      %v355 = vlaneseq
      %v356 = vshrl.u32 %v355, 7
      %v357 = vsub.s32 %v354, %v356
      %v358 = vrot.slane %v351, %v357
      %v359 = vcombine.low %v342, %v343
      %v361 = vunpack.c.l.s4 1966171168
      %v362 = vunpack.c.0.s8 %v361
      %v363 = vlaneseq
      %v364 = vshrl.u32 %v363, 7
      %v365 = vsub.s32 %v362, %v364
      %v366 = vrot.slane %v359, %v365
      %v368 = vunpack.c.l.s4 1966171168
      %v369 = vunpack.c.0.s8 %v368
      %v370 = vlaneseq
      %v371 = vshrl.u32 %v370, 7
      %v372 = vsub.s32 %v369, %v371
      %v373 = vrot.slane %v366, %v372
      %374 = vst.msk [vmem:[#allocation6] sm:$0x3] %vm319, %v358
      %375 = vst.msk [vmem:[#allocation6 + $0x2] sm:$0x3] %vm319, %v373
    $region17: #{tpu_custom_call.1} parent=1 // pred_fallthru
      _
    // Predicated region
    $region18: #{tpu_custom_call.1} parent=1 // pred_check
      _
    $region19: #{tpu_custom_call.1} parent=1 // pred_check_branch
      %377 = sbr.rel (0) target = $region21
    $region20: #{tpu_custom_call.1} parent=1 // pred_region
      %s379 = ssub.s32 64, 64
      %380 = vsyncadd [#allocation4], %s379
      %s381 = sshll.u32 [#allocation5], 4
      %s382 = int_to_ptr.vmem [resolvable:$true] %s381
      %387 = dma.vmem_to_hbm [thread:$0]  %s382, 64, %s1, [#allocation4], 32, 32, 2
    $region21: #{tpu_custom_call.1} parent=1 // pred_fallthru
      _
    // Predicated region
    $region22: #{tpu_custom_call.1} parent=1 // pred_check
      _
    $region23: #{tpu_custom_call.1} parent=1 // pred_check_branch
      %389 = sbr.rel (0) target = $region25
    $region24: #{tpu_custom_call.1} parent=1 // pred_region
      %s391 = ssub.s32 64, 64
      %392 = vsyncadd [#allocation7], %s391
      %s393 = sshll.u32 [#allocation6], 4
      %s394 = int_to_ptr.vmem [resolvable:$true] %s393
      %399 = dma.vmem_to_hbm [thread:$0]  %s394, 64, %s2, [#allocation7], 32, 32, 2
    $region25: #{tpu_custom_call.1} parent=1 // pred_fallthru
      _
    // Predicated region
    $region26: #{tpu_custom_call.1} parent=1 // pred_check
      _
    $region27: #{tpu_custom_call.1} parent=1 // pred_check_branch
      %401 = sbr.rel (0) target = $region29
    $region28: #{tpu_custom_call.1} parent=1 // pred_region
      %402 = dma.done [#allocation4], 64
    $region29: #{tpu_custom_call.1} parent=1 // pred_fallthru
      _
    // Predicated region
    $region30: #{tpu_custom_call.1} parent=1 // pred_check
      _
    $region31: #{tpu_custom_call.1} parent=1 // pred_check_branch
      %404 = sbr.rel (0) target = $region33
    $region32: #{tpu_custom_call.1} parent=1 // pred_region
      %405 = dma.done [#allocation7], 64
    $region33: #{tpu_custom_call.1} parent=1 // pred_fallthru
      _
    %406 = vsyncpa [#allocation3], 1
    %407 = vsyncpa [#allocation4], 1
    %408 = vsyncpa [#allocation7], 1

</llo_original>
